<compile_context>
chip_gen: v7x
topology: tpu7x:2x2x1
jax: 0.10.0
libtpu: 0.0.40
codegen_flags: <defaults>
</compile_context>

<pallas_src>
import functools

import jax
import jax.numpy as jnp
from jax.experimental import pallas as pl
from jax.experimental.pallas import tpu as pltpu

_LANE = 128     # lane width (last dim)
_SUBLANE = 16   # row granularity (covers f32 (8) and bf16 (16) sublane packing)


def _round_up(x, m):
    return (x + m - 1) // m * m


def _silu(x):
    # SiLU in f32: exp goes to the EUP slot, leaving the VALU mostly free.
    return x * jax.nn.sigmoid(x)


def _mlp_kernel(x_ref, w1_ref, b1_ref, w2_ref, b2_ref, w3_ref, b3_ref, o_ref,
                *, residual, last_act):
    x = x_ref[...]                                    # (TILE_N, Din_p), compute_dtype

    h = jnp.dot(x, w1_ref[...], preferred_element_type=jnp.float32)
    h = _silu(h + b1_ref[...])                        # f32 bias add + activation

    h = jnp.dot(h.astype(w2_ref.dtype), w2_ref[...],
                preferred_element_type=jnp.float32)
    h = _silu(h + b2_ref[...])

    y = jnp.dot(h.astype(w3_ref.dtype), w3_ref[...],
                preferred_element_type=jnp.float32)
    y = y + b3_ref[...]
    if last_act:
        y = _silu(y)
    if residual:
        y = y + x.astype(jnp.float32)

    o_ref[...] = y.astype(o_ref.dtype)


def _vmem_budget(tile, d_in, d_hid, d_out, compute_dtype, out_dtype):
    cb = jnp.dtype(compute_dtype).itemsize
    ob = jnp.dtype(out_dtype).itemsize
    weights = (d_in * d_hid + d_hid * d_hid + d_hid * d_out) * cb
    biases = (2 * d_hid + d_out) * 4
    io = 2 * tile * d_in * cb + 2 * tile * d_out * ob          # double-buffered x / out
    inter = 3 * tile * max(d_hid, d_out) * 4                   # live f32 intermediates
    total = 2 * (weights + biases + io + inter) + (2 << 20)    # 2x headroom + margin
    # Clamp to 64 MiB so the same setting is valid on v7x (64 MiB physical VMEM).
    return int(min(max(total, 16 << 20), 64 << 20))


def base_mlp_pallas(x, params, *, residual=False, last_act=False,
                    tile_n=256, compute_dtype=None):
    """x: [N, input_dim]; params: w1,b1,w2,b2,w3,b3 with w: [in, out], b: [1, out].

    compute_dtype: dtype fed to the MXU (bf16 recommended); accumulation is f32.
    """
    n, d_in = x.shape
    d_hid = params["w1"].shape[1]
    d_out = params["w3"].shape[1]
    if residual:
        assert d_out == d_in, "residual requires output_dim == input_dim"
    out_dtype = x.dtype
    if compute_dtype is None:
        compute_dtype = x.dtype

    # Lane-dense feature dims, sublane/tile-dense rows.
    d_in_p = _round_up(d_in, _LANE)
    d_hid_p = _round_up(d_hid, _LANE)
    d_out_p = _round_up(d_out, _LANE)
    tile = _round_up(min(tile_n, _round_up(n, _SUBLANE)), _SUBLANE)
    n_p = _round_up(n, tile)

    def pad2(a, rows, cols):
        return jnp.pad(a, ((0, rows - a.shape[0]), (0, cols - a.shape[1])))

    xp = pad2(x, n_p, d_in_p).astype(compute_dtype)
    w1 = pad2(params["w1"], d_in_p, d_hid_p).astype(compute_dtype)
    w2 = pad2(params["w2"], d_hid_p, d_hid_p).astype(compute_dtype)
    w3 = pad2(params["w3"], d_hid_p, d_out_p).astype(compute_dtype)
    b1 = pad2(params["b1"], 1, d_hid_p).astype(jnp.float32)
    b2 = pad2(params["b2"], 1, d_hid_p).astype(jnp.float32)
    b3 = pad2(params["b3"], 1, d_out_p).astype(jnp.float32)

    kernel = functools.partial(_mlp_kernel, residual=residual, last_act=last_act)

    row_spec = lambda d: pl.BlockSpec((tile, d), lambda i: (i, 0))        # tiled over rows
    resident = lambda a: pl.BlockSpec(a.shape, lambda i: (0, 0))          # stays in VMEM

    out_p = pl.pallas_call(
        kernel,
        out_shape=jax.ShapeDtypeStruct((n_p, d_out_p), out_dtype),
        grid_spec=pltpu.PrefetchScalarGridSpec(
            num_scalar_prefetch=0,
            grid=(n_p // tile,),
            in_specs=[
                row_spec(d_in_p),
                resident(w1), resident(b1),
                resident(w2), resident(b2),
                resident(w3), resident(b3),
            ],
            out_specs=row_spec(d_out_p),
        ),
        compiler_params=pltpu.CompilerParams(
            dimension_semantics=("parallel",),
            vmem_limit_bytes=_vmem_budget(tile, d_in_p, d_hid_p, d_out_p,
                                          compute_dtype, out_dtype),
        ),
        # TODO(synk): if hidden_dim grows so w2 no longer fits resident VMEM
        # (notably on v7x's 64 MiB), K-tile the 2nd/3rd matmul in-kernel with an
        # f32 accumulator instead of shrinking the row tile.
    )(xp, w1, b1, w2, b2, w3, b3)

    return out_p[:n, :d_out]


def init_params(key, input_dim, hidden_dim, output_dim, dtype=jnp.float32):
    """Deterministic nn.Linear-style init (uniform +/- 1/sqrt(fan_in))."""
    ks = jax.random.split(key, 6)

    def linear(kw, kb, fan_in, fan_out):
        bound = 1.0 / jnp.sqrt(jnp.asarray(fan_in, dtype=jnp.float32))
        w = jax.random.uniform(kw, (fan_in, fan_out), dtype, -bound, bound)
        b = jax.random.uniform(kb, (1, fan_out), dtype, -bound, bound)
        return w, b

    w1, b1 = linear(ks[0], ks[1], input_dim, hidden_dim)
    w2, b2 = linear(ks[2], ks[3], hidden_dim, hidden_dim)
    w3, b3 = linear(ks[4], ks[5], hidden_dim, output_dim)
    return dict(w1=w1, b1=b1, w2=w2, b2=b2, w3=w3, b3=b3)


def base_mlp_reference(x, params, *, residual=False, last_act=False):
    """Pure-JAX reference matching the PyTorch forward."""
    h = _silu(x @ params["w1"] + params["b1"])
    h = _silu(h @ params["w2"] + params["b2"])
    y = h @ params["w3"] + params["b3"]
    if last_act:
        y = _silu(y)
    if residual:
        y = y + x
    return y


if __name__ == "__main__":
    key = jax.random.PRNGKey(0)
    k_x, k_p, k_x2, k_p2 = jax.random.split(key, 4)

    # --- Check 1: small shapes, residual, exact f32 path ---------------------
    batch, input_dim, hidden_dim, output_dim = 8, 32, 32, 32
    x = jax.random.normal(k_x, (batch, input_dim), dtype=jnp.float32)
    params = init_params(k_p, input_dim, hidden_dim, output_dim)

    y = base_mlp_pallas(x, params, residual=True, last_act=False)
    y = jax.block_until_ready(y)
    y_ref = base_mlp_reference(x, params, residual=True, last_act=False)
    assert y.shape == (batch, output_dim)
    assert jnp.allclose(y, y_ref, atol=1e-5, rtol=1e-5), "f32 mismatch vs reference"

    # bf16 MXU path (f32 accumulation) — looser tolerance.
    y_bf16 = jax.block_until_ready(
        base_mlp_pallas(x, params, residual=True, last_act=False,
                        compute_dtype=jnp.bfloat16))
    assert jnp.allclose(y_bf16, y_ref, atol=5e-2, rtol=5e-2), "bf16 mismatch vs reference"

    # --- Check 2: ragged N, multiple row tiles, last_act ----------------------
    batch2, in2, hid2, out2 = 300, 32, 64, 48
    x2 = jax.random.normal(k_x2, (batch2, in2), dtype=jnp.float32)
    params2 = init_params(k_p2, in2, hid2, out2)

    y2 = jax.block_until_ready(
        base_mlp_pallas(x2, params2, residual=False, last_act=True, tile_n=128))
    y2_ref = base_mlp_reference(x2, params2, residual=False, last_act=True)
    assert y2.shape == (batch2, out2)
    assert jnp.allclose(y2, y2_ref, atol=1e-5, rtol=1e-5), "tiled mismatch vs reference"

    print("KERNEL_OK")
</pallas_src>

<mosaic_0001>
module attributes {stable_mosaic.version = 11 : i64} {
  func.func @_mlp_kernel(%arg0: i32, %arg1: memref<16x128xf32, #tpu.memory_space<vmem>>, %arg2: memref<128x128xf32, #tpu.memory_space<vmem>>, %arg3: memref<1x128xf32, #tpu.memory_space<vmem>>, %arg4: memref<128x128xf32, #tpu.memory_space<vmem>>, %arg5: memref<1x128xf32, #tpu.memory_space<vmem>>, %arg6: memref<128x128xf32, #tpu.memory_space<vmem>>, %arg7: memref<1x128xf32, #tpu.memory_space<vmem>>, %arg8: memref<16x128xf32, #tpu.memory_space<vmem>>) attributes {dimension_semantics = [#tpu.dimension_semantics<parallel>], iteration_bounds = array<i64: 1>, scalar_prefetch = 0 : i64, scratch_operands = 0 : i64, tpu.core_type = #tpu.core_type<tc>, window_params = [{transform_indices = @transform_0, window_bounds = array<i64: 16, 128>}, {pipeline_mode = #tpu.pipeline_mode<synchronous>, transform_indices = @transform_1, window_bounds = array<i64: 128, 128>}, {pipeline_mode = #tpu.pipeline_mode<synchronous>, transform_indices = @transform_2, window_bounds = array<i64: 1, 128>}, {pipeline_mode = #tpu.pipeline_mode<synchronous>, transform_indices = @transform_3, window_bounds = array<i64: 128, 128>}, {pipeline_mode = #tpu.pipeline_mode<synchronous>, transform_indices = @transform_4, window_bounds = array<i64: 1, 128>}, {pipeline_mode = #tpu.pipeline_mode<synchronous>, transform_indices = @transform_5, window_bounds = array<i64: 128, 128>}, {pipeline_mode = #tpu.pipeline_mode<synchronous>, transform_indices = @transform_6, window_bounds = array<i64: 1, 128>}, {transform_indices = @transform_7, window_bounds = array<i64: 16, 128>}]} {
    %c0 = arith.constant 0 : index
    %c0_0 = arith.constant 0 : index
    %0 = vector.load %arg1[%c0, %c0_0] : memref<16x128xf32, #tpu.memory_space<vmem>>, vector<16x128xf32>
    %c0_1 = arith.constant 0 : index
    %c0_2 = arith.constant 0 : index
    %1 = vector.load %arg2[%c0_1, %c0_2] : memref<128x128xf32, #tpu.memory_space<vmem>>, vector<128x128xf32>
    %cst = arith.constant dense<0.000000e+00> : vector<16x128xf32>
    %2 = tpu.matmul %0, %1, %cst {dimension_numbers = #tpu.dot_dimension_numbers<[1], [0], [0], [1], [0, 0, 1, 1], [], []>} : vector<16x128xf32>, vector<128x128xf32>, vector<16x128xf32> -> vector<16x128xf32>
    %c0_3 = arith.constant 0 : index
    %c0_4 = arith.constant 0 : index
    %3 = vector.load %arg3[%c0_3, %c0_4] : memref<1x128xf32, #tpu.memory_space<vmem>>, vector<1x128xf32>
    %4 = vector.broadcast %3 : vector<1x128xf32> to vector<16x128xf32>
    %5 = arith.addf %2, %4 : vector<16x128xf32>
    %6 = arith.negf %5 : vector<16x128xf32>
    %7 = math.exp %6 : vector<16x128xf32>
    %cst_5 = arith.constant 1.000000e+00 : f32
    %8 = vector.broadcast %cst_5 : f32 to vector<16x128xf32>
    %9 = arith.addf %8, %7 : vector<16x128xf32>
    %10 = arith.divf %8, %9 : vector<16x128xf32>
    %11 = arith.mulf %5, %10 : vector<16x128xf32>
    %c0_6 = arith.constant 0 : index
    %c0_7 = arith.constant 0 : index
    %12 = vector.load %arg4[%c0_6, %c0_7] : memref<128x128xf32, #tpu.memory_space<vmem>>, vector<128x128xf32>
    %cst_8 = arith.constant dense<0.000000e+00> : vector<16x128xf32>
    %13 = tpu.matmul %11, %12, %cst_8 {dimension_numbers = #tpu.dot_dimension_numbers<[1], [0], [0], [1], [0, 0, 1, 1], [], []>} : vector<16x128xf32>, vector<128x128xf32>, vector<16x128xf32> -> vector<16x128xf32>
    %c0_9 = arith.constant 0 : index
    %c0_10 = arith.constant 0 : index
    %14 = vector.load %arg5[%c0_9, %c0_10] : memref<1x128xf32, #tpu.memory_space<vmem>>, vector<1x128xf32>
    %15 = vector.broadcast %14 : vector<1x128xf32> to vector<16x128xf32>
    %16 = arith.addf %13, %15 : vector<16x128xf32>
    %17 = arith.negf %16 : vector<16x128xf32>
    %18 = math.exp %17 : vector<16x128xf32>
    %cst_11 = arith.constant 1.000000e+00 : f32
    %19 = vector.broadcast %cst_11 : f32 to vector<16x128xf32>
    %20 = arith.addf %19, %18 : vector<16x128xf32>
    %21 = arith.divf %19, %20 : vector<16x128xf32>
    %22 = arith.mulf %16, %21 : vector<16x128xf32>
    %c0_12 = arith.constant 0 : index
    %c0_13 = arith.constant 0 : index
    %23 = vector.load %arg6[%c0_12, %c0_13] : memref<128x128xf32, #tpu.memory_space<vmem>>, vector<128x128xf32>
    %cst_14 = arith.constant dense<0.000000e+00> : vector<16x128xf32>
    %24 = tpu.matmul %22, %23, %cst_14 {dimension_numbers = #tpu.dot_dimension_numbers<[1], [0], [0], [1], [0, 0, 1, 1], [], []>} : vector<16x128xf32>, vector<128x128xf32>, vector<16x128xf32> -> vector<16x128xf32>
    %c0_15 = arith.constant 0 : index
    %c0_16 = arith.constant 0 : index
    %25 = vector.load %arg7[%c0_15, %c0_16] : memref<1x128xf32, #tpu.memory_space<vmem>>, vector<1x128xf32>
    %26 = vector.broadcast %25 : vector<1x128xf32> to vector<16x128xf32>
    %27 = arith.addf %24, %26 : vector<16x128xf32>
    %28 = arith.addf %27, %0 : vector<16x128xf32>
    %c0_17 = arith.constant 0 : index
    %c0_18 = arith.constant 0 : index
    %29 = vector.load %arg8[%c0_17, %c0_18] : memref<16x128xf32, #tpu.memory_space<vmem>>, vector<16x128xf32>
    tpu.vector_store %arg8[%c0_17, %c0_18], %28 {strides = array<i32>} : memref<16x128xf32, #tpu.memory_space<vmem>>, vector<16x128xf32>,
    return
  }
  func.func @transform_0(%arg0: i32) -> (i32, i32) {
    %c0_i32 = arith.constant 0 : i32
    %c0_i32_0 = arith.constant 0 : i32
    return %arg0, %c0_i32 : i32, i32
  }
  func.func @transform_1(%arg0: i32) -> (i32, i32) {
    %c0_i32 = arith.constant 0 : i32
    %c0_i32_0 = arith.constant 0 : i32
    %c0_i32_1 = arith.constant 0 : i32
    return %c0_i32, %c0_i32_0 : i32, i32
  }
  func.func @transform_2(%arg0: i32) -> (i32, i32) {
    %c0_i32 = arith.constant 0 : i32
    %c0_i32_0 = arith.constant 0 : i32
    %c0_i32_1 = arith.constant 0 : i32
    return %c0_i32, %c0_i32_0 : i32, i32
  }
  func.func @transform_3(%arg0: i32) -> (i32, i32) {
    %c0_i32 = arith.constant 0 : i32
    %c0_i32_0 = arith.constant 0 : i32
    %c0_i32_1 = arith.constant 0 : i32
    return %c0_i32, %c0_i32_0 : i32, i32
  }
  func.func @transform_4(%arg0: i32) -> (i32, i32) {
    %c0_i32 = arith.constant 0 : i32
    %c0_i32_0 = arith.constant 0 : i32
    %c0_i32_1 = arith.constant 0 : i32
    return %c0_i32, %c0_i32_0 : i32, i32
  }
  func.func @transform_5(%arg0: i32) -> (i32, i32) {
    %c0_i32 = arith.constant 0 : i32
    %c0_i32_0 = arith.constant 0 : i32
    %c0_i32_1 = arith.constant 0 : i32
    return %c0_i32, %c0_i32_0 : i32, i32
  }
  func.func @transform_6(%arg0: i32) -> (i32, i32) {
    %c0_i32 = arith.constant 0 : i32
    %c0_i32_0 = arith.constant 0 : i32
    %c0_i32_1 = arith.constant 0 : i32
    return %c0_i32, %c0_i32_0 : i32, i32
  }
  func.func @transform_7(%arg0: i32) -> (i32, i32) {
    %c0_i32 = arith.constant 0 : i32
    %c0_i32_0 = arith.constant 0 : i32
    return %arg0, %c0_i32 : i32, i32
  }
}

</mosaic_0001>

<llo_original>
// kernel: tpu_custom_call.1
$region0: #{tpu_custom_call.1}
  #allocation0 [shape = 'u32[]', space=smem, size = 0x4, offset = 0x4, fixed_abs, tag = 'smem constant byte address 0x4 - core index']
  #allocation1 [shape = 'u32[144,128]{1,0:T(1,128)}', space=vmem, size = 0x12000, scoped, tag = 'internal scratch']
  %s0 = inlined_call_operand.hbm [shape: f32[16,128], index: 0, kind: input, shape index: {}]
  %s1 = inlined_call_operand.hbm [shape: f32[128,128], index: 1, kind: input, shape index: {}]
  %s2 = inlined_call_operand.vmem [shape: f32[1,128], index: 2, kind: input, shape index: {}]
  %s3 = inlined_call_operand.hbm [shape: f32[128,128], index: 3, kind: input, shape index: {}]
  %s4 = inlined_call_operand.vmem [shape: f32[1,128], index: 4, kind: input, shape index: {}]
  %s5 = inlined_call_operand.hbm [shape: f32[128,128], index: 5, kind: input, shape index: {}]
  %s6 = inlined_call_operand.vmem [shape: f32[1,128], index: 6, kind: input, shape index: {}]
  %s7 = inlined_call_operand.hbm [shape: f32[16,128], index: 7, kind: output, shape index: {}]
  %s8 = sld [smem:[#allocation0]]
  $region54: #{tpu_custom_call.1} parent=0
    _
  %s10 = ssub.s32 1, %s8
  %s11 = scalar_select 0, %s10, %s8
  $region1: #{tpu_custom_call.1} parent=0
    #allocation2 [shape = 'u8[8192]{0}', space=vmem, size = 0x2000, scoped, tag = 'input window, operand 0, single buffered']
    #allocation3 [shape = 's32[1]{0}', space=sflag, size = 0x4, scoped, tag = 'scoped memory for tpu_custom_call.1']
    #allocation4 [shape = 's32[1]{0}', space=sflag, size = 0x4, scoped, tag = 'scoped memory for tpu_custom_call.1']
    #allocation5 [shape = 'u8[65536]{0}', space=vmem, size = 0x10000, scoped, tag = 'input window, operand 1, single buffered']
    #allocation6 [shape = 's32[1]{0}', space=sflag, size = 0x4, scoped, tag = 'scoped memory for tpu_custom_call.1']
    #allocation7 [shape = 'u8[65536]{0}', space=vmem, size = 0x10000, scoped, tag = 'input window, operand 3, single buffered']
    #allocation8 [shape = 'u8[65536]{0}', space=vmem, size = 0x10000, scoped, tag = 'input window, operand 5, single buffered']
    #allocation9 [shape = 's32[1]{0}', space=sflag, size = 0x4, scoped, tag = 'scoped memory for tpu_custom_call.1']
    #allocation10 [shape = 'u8[8192]{0}', space=vmem, size = 0x2000, scoped, tag = 'output window, operand 0, single buffered']
    %12 = vsyncpa [#allocation3], 0
    %13 = vsyncpa [#allocation6], 0
    %14 = vsyncpa [#allocation9], 0
    %15 = vsyncpa [#allocation4], 0
    // Predicated region
    $region2: #{tpu_custom_call.1} parent=1 // pred_check
      _
    $region3: #{tpu_custom_call.1} parent=1 // pred_check_branch
      %17 = sbr.rel (0) target = $region5
    $region4: #{tpu_custom_call.1} parent=1 // pred_region
      %s19 = ssub.s32 256, 256
      %20 = vsyncadd [#allocation3], %s19
      %s21 = sshll.u32 [#allocation2], 4
      %s22 = int_to_ptr.vmem [resolvable:$true] %s21
      %27 = dma.hbm_to_vmem [thread:$0]  %s0, 256, %s22, [#allocation3], 128, 128, 8
    $region5: #{tpu_custom_call.1} parent=1 // pred_fallthru
      _
    // Predicated region
    $region6: #{tpu_custom_call.1} parent=1 // pred_check
      _
    $region7: #{tpu_custom_call.1} parent=1 // pred_check_branch
      %29 = sbr.rel (0) target = $region9
    $region8: #{tpu_custom_call.1} parent=1 // pred_region
      %s31 = ssub.s32 2048, 2048
      %32 = vsyncadd [#allocation6], %s31
      %s33 = sshll.u32 [#allocation5], 4
      %s34 = int_to_ptr.vmem [resolvable:$true] %s33
      %39 = dma.hbm_to_vmem [thread:$0]  %s1, 2048, %s34, [#allocation6], 128, 128, 8
    $region9: #{tpu_custom_call.1} parent=1 // pred_fallthru
      _
    // Predicated region
    $region10: #{tpu_custom_call.1} parent=1 // pred_check
      _
    $region11: #{tpu_custom_call.1} parent=1 // pred_check_branch
      %41 = sbr.rel (0) target = $region13
    $region12: #{tpu_custom_call.1} parent=1 // pred_region
      _
    $region13: #{tpu_custom_call.1} parent=1 // pred_fallthru
      _
    // Predicated region
    $region14: #{tpu_custom_call.1} parent=1 // pred_check
      _
    $region15: #{tpu_custom_call.1} parent=1 // pred_check_branch
      %43 = sbr.rel (0) target = $region17
    $region16: #{tpu_custom_call.1} parent=1 // pred_region
      %s45 = ssub.s32 2048, 2048
      %46 = vsyncadd [#allocation6], %s45
      %s47 = sshll.u32 [#allocation7], 4
      %s48 = int_to_ptr.vmem [resolvable:$true] %s47
      %53 = dma.hbm_to_vmem [thread:$0]  %s3, 2048, %s48, [#allocation6], 128, 128, 8
    $region17: #{tpu_custom_call.1} parent=1 // pred_fallthru
      _
    // Predicated region
    $region18: #{tpu_custom_call.1} parent=1 // pred_check
      _
    $region19: #{tpu_custom_call.1} parent=1 // pred_check_branch
      %55 = sbr.rel (0) target = $region21
    $region20: #{tpu_custom_call.1} parent=1 // pred_region
      _
    $region21: #{tpu_custom_call.1} parent=1 // pred_fallthru
      _
    // Predicated region
    $region22: #{tpu_custom_call.1} parent=1 // pred_check
      _
    $region23: #{tpu_custom_call.1} parent=1 // pred_check_branch
      %57 = sbr.rel (0) target = $region25
    $region24: #{tpu_custom_call.1} parent=1 // pred_region
      %s59 = ssub.s32 2048, 2048
      %60 = vsyncadd [#allocation9], %s59
      %s61 = sshll.u32 [#allocation8], 4
      %s62 = int_to_ptr.vmem [resolvable:$true] %s61
      %67 = dma.hbm_to_vmem [thread:$0]  %s5, 2048, %s62, [#allocation9], 128, 128, 8
    $region25: #{tpu_custom_call.1} parent=1 // pred_fallthru
      _
    // Predicated region
    $region26: #{tpu_custom_call.1} parent=1 // pred_check
      _
    $region27: #{tpu_custom_call.1} parent=1 // pred_check_branch
      %69 = sbr.rel (0) target = $region29
    $region28: #{tpu_custom_call.1} parent=1 // pred_region
      _
    $region29: #{tpu_custom_call.1} parent=1 // pred_fallthru
      _
    // Predicated region
    $region30: #{tpu_custom_call.1} parent=1 // pred_check
      _
    $region31: #{tpu_custom_call.1} parent=1 // pred_check_branch
      %71 = sbr.rel (0) target = $region33
    $region32: #{tpu_custom_call.1} parent=1 // pred_region
      %72 = dma.done [#allocation3], 256
    $region33: #{tpu_custom_call.1} parent=1 // pred_fallthru
      _
    // Predicated region
    $region34: #{tpu_custom_call.1} parent=1 // pred_check
      _
    $region35: #{tpu_custom_call.1} parent=1 // pred_check_branch
      %74 = sbr.rel (0) target = $region37
    $region36: #{tpu_custom_call.1} parent=1 // pred_region
      %75 = dma.done [#allocation6], 2048
    $region37: #{tpu_custom_call.1} parent=1 // pred_fallthru
      _
    // Predicated region
    $region38: #{tpu_custom_call.1} parent=1 // pred_check
      _
    $region39: #{tpu_custom_call.1} parent=1 // pred_check_branch
      %77 = sbr.rel (0) target = $region41
    $region40: #{tpu_custom_call.1} parent=1 // pred_region
      %78 = dma.done [#allocation6], 2048
    $region41: #{tpu_custom_call.1} parent=1 // pred_fallthru
      _
    // Predicated region
    $region42: #{tpu_custom_call.1} parent=1 // pred_check
      _
    $region43: #{tpu_custom_call.1} parent=1 // pred_check_branch
      %80 = sbr.rel (0) target = $region45
    $region44: #{tpu_custom_call.1} parent=1 // pred_region
      %81 = dma.done [#allocation9], 2048
    $region45: #{tpu_custom_call.1} parent=1 // pred_fallthru
      _
    %v82 = vld [vmem:[#allocation2] sm:$0xff]
    %v83 = vld [vmem:[#allocation2 + $0x8] sm:$0xff]
    %v84 = vld [vmem:[#allocation5] sm:$0xff]
    %v85 = vld [vmem:[#allocation5 + $0x8] sm:$0xff]
    %v86 = vld [vmem:[#allocation5 + $0x10] sm:$0xff]
    %v87 = vld [vmem:[#allocation5 + $0x18] sm:$0xff]
    %v88 = vld [vmem:[#allocation5 + $0x20] sm:$0xff]
    %v89 = vld [vmem:[#allocation5 + $0x28] sm:$0xff]
    %v90 = vld [vmem:[#allocation5 + $0x30] sm:$0xff]
    %v91 = vld [vmem:[#allocation5 + $0x38] sm:$0xff]
    %v92 = vld [vmem:[#allocation5 + $0x40] sm:$0xff]
    %v93 = vld [vmem:[#allocation5 + $0x48] sm:$0xff]
    %v94 = vld [vmem:[#allocation5 + $0x50] sm:$0xff]
    %v95 = vld [vmem:[#allocation5 + $0x58] sm:$0xff]
    %v96 = vld [vmem:[#allocation5 + $0x60] sm:$0xff]
    %v97 = vld [vmem:[#allocation5 + $0x68] sm:$0xff]
    %v98 = vld [vmem:[#allocation5 + $0x70] sm:$0xff]
    %v99 = vld [vmem:[#allocation5 + $0x78] sm:$0xff]
    %v100 = vld [vmem:[%s2] sm:$0x1]
    %v102 = vlaneseq
    %v103 = vshrl.u32 %v102, 7
    %v104 = vsub.s32 0, %v103
    %v105 = vrot.slane %v100, %v104
    %107 = vmatprep.subr.mxu0 0.0
    %108 = vmatpush1.msra.mxu0 %v84
    %109 = vmatprep.subr.mxu0 0.0
    %110 = vmatpush1.msra.mxu0 %v85
    %111 = vmatprep.subr.mxu0 0.0
    %112 = vmatpush1.msra.mxu0 %v86
    %113 = vmatprep.subr.mxu0 0.0
    %114 = vmatpush1.msra.mxu0 %v87
    %115 = vmatprep.subr.mxu0 0.0
    %116 = vmatpush1.msra.mxu0 %v88
    %117 = vmatprep.subr.mxu0 0.0
    %118 = vmatpush1.msra.mxu0 %v89
    %119 = vmatprep.subr.mxu0 0.0
    %120 = vmatpush1.msra.mxu0 %v90
    %121 = vmatprep.subr.mxu0 0.0
    %122 = vmatpush1.msra.mxu0 %v91
    %123 = vmatprep.subr.mxu0 0.0
    %124 = vmatpush1.msra.mxu0 %v92
    %125 = vmatprep.subr.mxu0 0.0
    %126 = vmatpush1.msra.mxu0 %v93
    %127 = vmatprep.subr.mxu0 0.0
    %128 = vmatpush1.msra.mxu0 %v94
    %129 = vmatprep.subr.mxu0 0.0
    %130 = vmatpush1.msra.mxu0 %v95
    %131 = vmatprep.subr.mxu0 0.0
    %132 = vmatpush1.msra.mxu0 %v96
    %133 = vmatprep.subr.mxu0 0.0
    %134 = vmatpush1.msra.mxu0 %v97
    %135 = vmatprep.subr.mxu0 0.0
    %136 = vmatpush1.msra.mxu0 %v98
    %137 = vmatprep.subr.mxu0 0.0
    %138 = vmatpush1.msra.mxu0 %v99
    %139 = vmatprep.subr.mxu0 0.0
    %140 = vmatpush1.msra.mxu0 0.0
    %141 = vmatprep.subr.mxu0 0.0
    %142 = vmatpush1.msra.mxu0 0.0
    %143 = vmatprep.subr.mxu0 0.0
    %144 = vmatpush1.msra.mxu0 0.0
    %145 = vmatprep.subr.mxu0 0.0
    %146 = vmatpush1.msra.mxu0 0.0
    %147 = vmatprep.subr.mxu0 0.0
    %148 = vmatpush1.msra.mxu0 0.0
    %149 = vmatprep.subr.mxu0 0.0
    %150 = vmatpush1.msra.mxu0 0.0
    %151 = vmatprep.subr.mxu0 0.0
    %152 = vmatpush1.msra.mxu0 0.0
    %153 = vmatprep.subr.mxu0 0.0
    %154 = vmatpush1.msra.mxu0 0.0
    %155 = vmatprep.subr.mxu0 0.0
    %156 = vmatpush1.msra.mxu0 0.0
    %157 = vmatprep.subr.mxu0 0.0
    %158 = vmatpush1.msra.mxu0 0.0
    %159 = vmatprep.subr.mxu0 0.0
    %160 = vmatpush1.msra.mxu0 0.0
    %161 = vmatprep.subr.mxu0 0.0
    %162 = vmatpush1.msra.mxu0 0.0
    %163 = vmatprep.subr.mxu0 0.0
    %164 = vmatpush1.msra.mxu0 0.0
    %165 = vmatprep.subr.mxu0 0.0
    %166 = vmatpush1.msra.mxu0 0.0
    %167 = vmatprep.subr.mxu0 0.0
    %168 = vmatpush1.msra.mxu0 0.0
    %169 = vmatprep.subr.mxu0 0.0
    %170 = vmatpush1.msra.mxu0 0.0
    %171 = vmatprep.mubr.f32.mxu0 0.0
    %172 = vmatmul.mubr.f32.gmra.mrb[0].mxu0 %v82
    %v173 = vpop.f32.mrb[0].mxu0
    %v174 = vadd.f32 %v105, %v173
    %v175 = vpop.f32.mrb[0].mxu0
    %176 = vmatprep.mubr.f32.mxu0 0.0
    %177 = vmatmul.mubr.f32.gmra.mrb[0].mxu0 %v83
    %v178 = vpop.f32.mrb[0].mxu0
    %v179 = vadd.f32 %v105, %v178
    %v180 = vpop.f32.mrb[0].mxu0
    %181 = vdwg.mxu0
    %v182 = vxor.u32 %v174, 2147483648
    %v183 = vxor.u32 %v179, 2147483648
    %v184 = vmul.f32 %v182, 1.442695
    %v185 = vpow.pop %v184
    %v186 = vmul.f32 %v183, 1.442695
    %v187 = vpow.pop %v186
    %v188 = vadd.f32 %v185, 1.0
    %v189 = vadd.f32 %v187, 1.0
    %v190 = vrcp.pop %v188
    %v191 = vmul.f32 1.0, %v190
    %v192 = vrcp.pop %v189
    %v193 = vmul.f32 1.0, %v192
    %v194 = vmul.f32 %v174, %v191
    %v195 = vmul.f32 %v179, %v193
    %v196 = vld [vmem:[#allocation7] sm:$0xff]
    %v197 = vld [vmem:[#allocation7 + $0x8] sm:$0xff]
    %v198 = vld [vmem:[#allocation7 + $0x10] sm:$0xff]
    %v199 = vld [vmem:[#allocation7 + $0x18] sm:$0xff]
    %v200 = vld [vmem:[#allocation7 + $0x20] sm:$0xff]
    %v201 = vld [vmem:[#allocation7 + $0x28] sm:$0xff]
    %v202 = vld [vmem:[#allocation7 + $0x30] sm:$0xff]
    %v203 = vld [vmem:[#allocation7 + $0x38] sm:$0xff]
    %v204 = vld [vmem:[#allocation7 + $0x40] sm:$0xff]
    %v205 = vld [vmem:[#allocation7 + $0x48] sm:$0xff]
    %v206 = vld [vmem:[#allocation7 + $0x50] sm:$0xff]
    %v207 = vld [vmem:[#allocation7 + $0x58] sm:$0xff]
    %v208 = vld [vmem:[#allocation7 + $0x60] sm:$0xff]
    %v209 = vld [vmem:[#allocation7 + $0x68] sm:$0xff]
    %v210 = vld [vmem:[#allocation7 + $0x70] sm:$0xff]
    %v211 = vld [vmem:[#allocation7 + $0x78] sm:$0xff]
    %v212 = vld [vmem:[%s4] sm:$0x1]
    %v214 = vlaneseq
    %v215 = vshrl.u32 %v214, 7
    %v216 = vsub.s32 0, %v215
    %v217 = vrot.slane %v212, %v216
    %219 = vmatprep.subr.mxu0 0.0
    %220 = vmatpush1.msra.mxu0 %v196
    %221 = vmatprep.subr.mxu0 0.0
    %222 = vmatpush1.msra.mxu0 %v197
    %223 = vmatprep.subr.mxu0 0.0
    %224 = vmatpush1.msra.mxu0 %v198
    %225 = vmatprep.subr.mxu0 0.0
    %226 = vmatpush1.msra.mxu0 %v199
    %227 = vmatprep.subr.mxu0 0.0
    %228 = vmatpush1.msra.mxu0 %v200
    %229 = vmatprep.subr.mxu0 0.0
    %230 = vmatpush1.msra.mxu0 %v201
    %231 = vmatprep.subr.mxu0 0.0
    %232 = vmatpush1.msra.mxu0 %v202
    %233 = vmatprep.subr.mxu0 0.0
    %234 = vmatpush1.msra.mxu0 %v203
    %235 = vmatprep.subr.mxu0 0.0
    %236 = vmatpush1.msra.mxu0 %v204
    %237 = vmatprep.subr.mxu0 0.0
    %238 = vmatpush1.msra.mxu0 %v205
    %239 = vmatprep.subr.mxu0 0.0
    %240 = vmatpush1.msra.mxu0 %v206
    %241 = vmatprep.subr.mxu0 0.0
    %242 = vmatpush1.msra.mxu0 %v207
    %243 = vmatprep.subr.mxu0 0.0
    %244 = vmatpush1.msra.mxu0 %v208
    %245 = vmatprep.subr.mxu0 0.0
    %246 = vmatpush1.msra.mxu0 %v209
    %247 = vmatprep.subr.mxu0 0.0
    %248 = vmatpush1.msra.mxu0 %v210
    %249 = vmatprep.subr.mxu0 0.0
    %250 = vmatpush1.msra.mxu0 %v211
    %251 = vmatprep.subr.mxu0 0.0
    %252 = vmatpush1.msra.mxu0 0.0
    %253 = vmatprep.subr.mxu0 0.0
    %254 = vmatpush1.msra.mxu0 0.0
    %255 = vmatprep.subr.mxu0 0.0
    %256 = vmatpush1.msra.mxu0 0.0
    %257 = vmatprep.subr.mxu0 0.0
    %258 = vmatpush1.msra.mxu0 0.0
    %259 = vmatprep.subr.mxu0 0.0
    %260 = vmatpush1.msra.mxu0 0.0
    %261 = vmatprep.subr.mxu0 0.0
    %262 = vmatpush1.msra.mxu0 0.0
    %263 = vmatprep.subr.mxu0 0.0
    %264 = vmatpush1.msra.mxu0 0.0
    %265 = vmatprep.subr.mxu0 0.0
    %266 = vmatpush1.msra.mxu0 0.0
    %267 = vmatprep.subr.mxu0 0.0
    %268 = vmatpush1.msra.mxu0 0.0
    %269 = vmatprep.subr.mxu0 0.0
    %270 = vmatpush1.msra.mxu0 0.0
    %271 = vmatprep.subr.mxu0 0.0
    %272 = vmatpush1.msra.mxu0 0.0
    %273 = vmatprep.subr.mxu0 0.0
    %274 = vmatpush1.msra.mxu0 0.0
    %275 = vmatprep.subr.mxu0 0.0
    %276 = vmatpush1.msra.mxu0 0.0
    %277 = vmatprep.subr.mxu0 0.0
    %278 = vmatpush1.msra.mxu0 0.0
    %279 = vmatprep.subr.mxu0 0.0
    %280 = vmatpush1.msra.mxu0 0.0
    %281 = vmatprep.subr.mxu0 0.0
    %282 = vmatpush1.msra.mxu0 0.0
    %283 = vmatprep.mubr.f32.mxu0 0.0
    %284 = vmatmul.mubr.f32.gmra.mrb[0].mxu0 %v194
    %v285 = vpop.f32.mrb[0].mxu0
    %v286 = vadd.f32 %v217, %v285
    %v287 = vpop.f32.mrb[0].mxu0
    %288 = vmatprep.mubr.f32.mxu0 0.0
    %289 = vmatmul.mubr.f32.gmra.mrb[0].mxu0 %v195
    %v290 = vpop.f32.mrb[0].mxu0
    %v291 = vadd.f32 %v217, %v290
    %v292 = vpop.f32.mrb[0].mxu0
    %293 = vdwg.mxu0
    %v294 = vxor.u32 %v286, 2147483648
    %v295 = vxor.u32 %v291, 2147483648
    %v296 = vmul.f32 %v294, 1.442695
    %v297 = vpow.pop %v296
    %v298 = vmul.f32 %v295, 1.442695
    %v299 = vpow.pop %v298
    %v300 = vadd.f32 %v297, 1.0
    %v301 = vadd.f32 %v299, 1.0
    %v302 = vrcp.pop %v300
    %v303 = vmul.f32 1.0, %v302
    %v304 = vrcp.pop %v301
    %v305 = vmul.f32 1.0, %v304
    %v306 = vmul.f32 %v286, %v303
    %v307 = vmul.f32 %v291, %v305
    %v308 = vld [vmem:[#allocation8] sm:$0xff]
    %v309 = vld [vmem:[#allocation8 + $0x8] sm:$0xff]
    %v310 = vld [vmem:[#allocation8 + $0x10] sm:$0xff]
    %v311 = vld [vmem:[#allocation8 + $0x18] sm:$0xff]
    %v312 = vld [vmem:[#allocation8 + $0x20] sm:$0xff]
    %v313 = vld [vmem:[#allocation8 + $0x28] sm:$0xff]
    %v314 = vld [vmem:[#allocation8 + $0x30] sm:$0xff]
    %v315 = vld [vmem:[#allocation8 + $0x38] sm:$0xff]
    %v316 = vld [vmem:[#allocation8 + $0x40] sm:$0xff]
    %v317 = vld [vmem:[#allocation8 + $0x48] sm:$0xff]
    %v318 = vld [vmem:[#allocation8 + $0x50] sm:$0xff]
    %v319 = vld [vmem:[#allocation8 + $0x58] sm:$0xff]
    %v320 = vld [vmem:[#allocation8 + $0x60] sm:$0xff]
    %v321 = vld [vmem:[#allocation8 + $0x68] sm:$0xff]
    %v322 = vld [vmem:[#allocation8 + $0x70] sm:$0xff]
    %v323 = vld [vmem:[#allocation8 + $0x78] sm:$0xff]
    %v324 = vld [vmem:[%s6] sm:$0x1]
    %v326 = vlaneseq
    %v327 = vshrl.u32 %v326, 7
    %v328 = vsub.s32 0, %v327
    %v329 = vrot.slane %v324, %v328
    %331 = vmatprep.subr.mxu0 0.0
    %332 = vmatpush1.msra.mxu0 %v308
    %333 = vmatprep.subr.mxu0 0.0
    %334 = vmatpush1.msra.mxu0 %v309
    %335 = vmatprep.subr.mxu0 0.0
    %336 = vmatpush1.msra.mxu0 %v310
    %337 = vmatprep.subr.mxu0 0.0
    %338 = vmatpush1.msra.mxu0 %v311
    %339 = vmatprep.subr.mxu0 0.0
    %340 = vmatpush1.msra.mxu0 %v312
    %341 = vmatprep.subr.mxu0 0.0
    %342 = vmatpush1.msra.mxu0 %v313
    %343 = vmatprep.subr.mxu0 0.0
    %344 = vmatpush1.msra.mxu0 %v314
    %345 = vmatprep.subr.mxu0 0.0
    %346 = vmatpush1.msra.mxu0 %v315
    %347 = vmatprep.subr.mxu0 0.0
    %348 = vmatpush1.msra.mxu0 %v316
    %349 = vmatprep.subr.mxu0 0.0
    %350 = vmatpush1.msra.mxu0 %v317
    %351 = vmatprep.subr.mxu0 0.0
    %352 = vmatpush1.msra.mxu0 %v318
    %353 = vmatprep.subr.mxu0 0.0
    %354 = vmatpush1.msra.mxu0 %v319
    %355 = vmatprep.subr.mxu0 0.0
    %356 = vmatpush1.msra.mxu0 %v320
    %357 = vmatprep.subr.mxu0 0.0
    %358 = vmatpush1.msra.mxu0 %v321
    %359 = vmatprep.subr.mxu0 0.0
    %360 = vmatpush1.msra.mxu0 %v322
    %361 = vmatprep.subr.mxu0 0.0
    %362 = vmatpush1.msra.mxu0 %v323
    %363 = vmatprep.subr.mxu0 0.0
    %364 = vmatpush1.msra.mxu0 0.0
    %365 = vmatprep.subr.mxu0 0.0
    %366 = vmatpush1.msra.mxu0 0.0
    %367 = vmatprep.subr.mxu0 0.0
    %368 = vmatpush1.msra.mxu0 0.0
    %369 = vmatprep.subr.mxu0 0.0
    %370 = vmatpush1.msra.mxu0 0.0
    %371 = vmatprep.subr.mxu0 0.0
    %372 = vmatpush1.msra.mxu0 0.0
    %373 = vmatprep.subr.mxu0 0.0
    %374 = vmatpush1.msra.mxu0 0.0
    %375 = vmatprep.subr.mxu0 0.0
    %376 = vmatpush1.msra.mxu0 0.0
    %377 = vmatprep.subr.mxu0 0.0
    %378 = vmatpush1.msra.mxu0 0.0
    %379 = vmatprep.subr.mxu0 0.0
    %380 = vmatpush1.msra.mxu0 0.0
    %381 = vmatprep.subr.mxu0 0.0
    %382 = vmatpush1.msra.mxu0 0.0
    %383 = vmatprep.subr.mxu0 0.0
    %384 = vmatpush1.msra.mxu0 0.0
    %385 = vmatprep.subr.mxu0 0.0
    %386 = vmatpush1.msra.mxu0 0.0
    %387 = vmatprep.subr.mxu0 0.0
    %388 = vmatpush1.msra.mxu0 0.0
    %389 = vmatprep.subr.mxu0 0.0
    %390 = vmatpush1.msra.mxu0 0.0
    %391 = vmatprep.subr.mxu0 0.0
    %392 = vmatpush1.msra.mxu0 0.0
    %393 = vmatprep.subr.mxu0 0.0
    %394 = vmatpush1.msra.mxu0 0.0
    %395 = vmatprep.mubr.f32.mxu0 0.0
    %396 = vmatmul.mubr.f32.gmra.mrb[0].mxu0 %v306
    %v397 = vpop.f32.mrb[0].mxu0
    %v398 = vadd.f32 %v329, %v397
    %v399 = vpop.f32.mrb[0].mxu0
    %400 = vmatprep.mubr.f32.mxu0 0.0
    %401 = vmatmul.mubr.f32.gmra.mrb[0].mxu0 %v307
    %v402 = vpop.f32.mrb[0].mxu0
    %v403 = vadd.f32 %v329, %v402
    %v404 = vpop.f32.mrb[0].mxu0
    %405 = vdwg.mxu0
    %v406 = vadd.f32 %v398, %v82
    %v407 = vadd.f32 %v403, %v83
    %408 = vst [vmem:[#allocation10] sm:$0xff] %v406
    %409 = vst [vmem:[#allocation10 + $0x8] sm:$0xff] %v407
    // Predicated region
    $region46: #{tpu_custom_call.1} parent=1 // pred_check
      _
    $region47: #{tpu_custom_call.1} parent=1 // pred_check_branch
      %411 = sbr.rel (0) target = $region49
    $region48: #{tpu_custom_call.1} parent=1 // pred_region
      %s413 = ssub.s32 256, 256
      %414 = vsyncadd [#allocation4], %s413
      %s415 = sshll.u32 [#allocation10], 4
      %s416 = int_to_ptr.vmem [resolvable:$true] %s415
      %421 = dma.vmem_to_hbm [thread:$0]  %s416, 256, %s7, [#allocation4], 128, 128, 8
    $region49: #{tpu_custom_call.1} parent=1 // pred_fallthru
      _
    // Predicated region
    $region50: #{tpu_custom_call.1} parent=1 // pred_check
      _
    $region51: #{tpu_custom_call.1} parent=1 // pred_check_branch
      %423 = sbr.rel (0) target = $region53
    $region52: #{tpu_custom_call.1} parent=1 // pred_region
      %424 = dma.done [#allocation4], 256
    $region53: #{tpu_custom_call.1} parent=1 // pred_fallthru
      _
    %425 = vsyncpa [#allocation3], 1
    %426 = vsyncpa [#allocation6], 1
    %427 = vsyncpa [#allocation9], 1
    %428 = vsyncpa [#allocation4], 1

</llo_original>
